<compile_context>
chip_gen: v7x
topology: tpu7x:2x2x1
jax: 0.10.0
libtpu: 0.0.40
codegen_flags: <defaults>
</compile_context>

<pallas_src>
import functools

import jax
import jax.numpy as jnp
from jax.experimental import pallas as pl
from jax.experimental.pallas import tpu as pltpu


def _round_up(a: int, m: int) -> int:
    return ((a + m - 1) // m) * m


def _kl_rows_kernel(x_ref, t_ref, out_ref, *, padding_idx, n_rows, vocab):
    """One (TN, TV) tile: per-row KL(t || exp(x)) partial sums, accumulated over kv."""
    i = pl.program_id(0)          # row-tile index      ('parallel')
    kv = pl.program_id(1)         # vocab-tile index    ('arbitrary' reduction)
    tn, tv = x_ref.shape

    x = x_ref[...].astype(jnp.float32)
    t = t_ref[...].astype(jnp.float32)

    # Global column ids of this vocab tile.  The padding column and any grid-padding
    # columns (when TV does not divide V) are folded into the positivity mask, so no
    # separate full-tile rewrite of `t` is needed.
    col = kv * tv + jax.lax.broadcasted_iota(jnp.int32, (1, tv), 1)
    pos = (t > 0.0) & (col != padding_idx) & (col < vocab)

    # KLDivLoss(reduction='none'): t * (log t - x); contribution is 0 where t == 0.
    logt = jnp.log(jnp.where(pos, t, jnp.float32(1.0)))
    kl = jnp.where(pos, t * (logt - x), jnp.float32(0.0))

    # Per-row partial sums; zero grid-padding rows (when TN does not divide N) so
    # garbage never reaches the accumulator, then relayout to a lane-dense slab.
    row = jnp.sum(kl, axis=1, keepdims=True)                          # (tn, 1)
    ridx = i * tn + jax.lax.broadcasted_iota(jnp.int32, (tn, 1), 0)
    row = jnp.where(ridx < n_rows, row, jnp.float32(0.0))
    row = row.reshape(1, 1, tn)                                       # (1, 1, tn)

    # The output block index is constant along kv -> it stays resident in VMEM and is
    # the accumulator for the vocab reduction.
    @pl.when(kv == 0)
    def _():
        out_ref[...] = jnp.zeros_like(out_ref)

    out_ref[...] += row


def _tile_plan(n, v, dtype):
    """Pick (row_tile, vocab_tile, vmem_limit_bytes) from dtype + TPU generation."""
    bpe = jnp.dtype(dtype).itemsize
    try:
        vmem_cap = getattr(pltpu.get_tpu_info(), "vmem_capacity_bytes",
                           64 * 1024 * 1024)
    except Exception:  # conservative default if the query is unavailable
        vmem_cap = 64 * 1024 * 1024

    small_vmem = vmem_cap <= 64 * 1024 * 1024            # v7x: 64 MiB per TensorCore
    budget = (36 if small_vmem else 48) * 1024 * 1024     # streaming inputs + temps
    vmem_limit = (48 if small_vmem else 64) * 1024 * 1024

    # Per tile element: 2 inputs x 2 pipeline buffers in `dtype` + ~2 f32 temporaries.
    bytes_per_elem = 4 * bpe + 8
    max_elems = max(8 * 128, budget // bytes_per_elem)

    v_pad = _round_up(v, 128)
    rows_full_v = ((max_elems // v_pad) // 8) * 8
    if rows_full_v >= 8:
        tv = v                                     # one vocab block per row tile
        tn = min(rows_full_v, _round_up(n, 8))
    else:
        tn = 8                                     # huge vocab: tile V, accumulate
        tv = min(v_pad, max(128, ((max_elems // tn) // 128) * 128))

    # v7x has 2 TensorCores: make sure the 'parallel' row axis has >= 2 steps.
    if pl.cdiv(n, tn) < 2 and n >= 16:
        tn = max(8, _round_up(-(-n // 2), 8))

    return tn, tv, vmem_limit


def label_smoothing(x, target, *, padding_idx, row_tile=None, vocab_tile=None):
    """Returns (sum_loss, batch_loss) matching the PyTorch module's forward."""
    N, V = x.shape
    assert target.shape == (N, V)

    tn, tv, vmem_limit = _tile_plan(N, V, x.dtype)
    if row_tile is not None:
        tn = row_tile
    if vocab_tile is not None:
        tv = vocab_tile

    n_row_tiles = pl.cdiv(N, tn)
    n_vocab_tiles = pl.cdiv(V, tv)

    kernel = functools.partial(
        _kl_rows_kernel, padding_idx=int(padding_idx), n_rows=N, vocab=V)

    bpe = jnp.dtype(x.dtype).itemsize
    cost = pl.CostEstimate(
        flops=4 * N * V,
        transcendentals=N * V,
        bytes_accessed=2 * N * V * bpe + 4 * n_row_tiles * tn,
    )

    row_sums = pl.pallas_call(
        kernel,
        out_shape=jax.ShapeDtypeStruct((n_row_tiles, 1, tn), jnp.float32),
        grid_spec=pltpu.PrefetchScalarGridSpec(
            num_scalar_prefetch=0,
            grid=(n_row_tiles, n_vocab_tiles),
            in_specs=[
                pl.BlockSpec((tn, tv), lambda i, kv: (i, kv)),   # x tile (log-probs)
                pl.BlockSpec((tn, tv), lambda i, kv: (i, kv)),   # target tile (probs)
            ],
            out_specs=pl.BlockSpec((1, 1, tn), lambda i, kv: (i, 0, 0)),
        ),
        compiler_params=pltpu.CompilerParams(
            dimension_semantics=("parallel", "arbitrary"),
            vmem_limit_bytes=vmem_limit,
        ),
        cost_estimate=cost,
    )(x, target)

    batch_loss = row_sums.reshape(-1)[:N]
    sum_loss = jnp.sum(batch_loss)
    return sum_loss, batch_loss


def _reference(x, target, padding_idx):
    # Pure-JAX reference for the module's forward (target mutation applied functionally).
    x32 = x.astype(jnp.float32)
    t32 = target.astype(jnp.float32).at[:, padding_idx].set(0.0)
    pos = t32 > 0
    kl = jnp.where(pos, t32 * (jnp.log(jnp.where(pos, t32, 1.0)) - x32), 0.0)
    return jnp.sum(kl), jnp.sum(kl, axis=1)


def _make_inputs(key, n, v, smoothing, dtype):
    kx, kt = jax.random.split(key)
    x = jax.nn.log_softmax(jax.random.normal(kx, (n, v), dtype=jnp.float32), axis=1)
    labels = jax.random.randint(kt, (n,), 0, v, dtype=jnp.int32)
    colr = jnp.arange(v)[None, :]
    target = jnp.full((n, v), smoothing / (v - 2), dtype=jnp.float32)
    target = jnp.where(colr == labels[:, None], 1.0 - smoothing, target)
    return x.astype(dtype), target.astype(dtype)


if __name__ == "__main__":
    k1, k2 = jax.random.split(jax.random.PRNGKey(0))

    # Case 1: small f32 problem, automatic tiling (exercises the >=2 row-tile clamp).
    padding_idx = 0
    x, target = _make_inputs(k1, 16, 256, 0.1, jnp.float32)
    sum_loss, batch_loss = label_smoothing(x, target, padding_idx=padding_idx)
    jax.block_until_ready((sum_loss, batch_loss))
    ref_sum, ref_batch = _reference(x, target, padding_idx)
    assert jnp.allclose(sum_loss, ref_sum, rtol=1e-5, atol=1e-5), (sum_loss, ref_sum)
    assert jnp.allclose(batch_loss, ref_batch, rtol=1e-5, atol=1e-5)

    # Case 2: ragged bf16 problem with forced vocab tiling (exercises the kv
    # accumulator path and the row/column edge masking).
    padding_idx2 = 3
    x2, t2 = _make_inputs(k2, 13, 200, 0.1, jnp.bfloat16)
    sum2, batch2 = label_smoothing(x2, t2, padding_idx=padding_idx2,
                                   row_tile=8, vocab_tile=128)
    jax.block_until_ready((sum2, batch2))
    ref_sum2, ref_batch2 = _reference(x2, t2, padding_idx2)
    assert jnp.allclose(sum2, ref_sum2, rtol=1e-5, atol=1e-5), (sum2, ref_sum2)
    assert jnp.allclose(batch2, ref_batch2, rtol=1e-5, atol=1e-5)

    print("KERNEL_OK")
</pallas_src>

<mosaic_0001>
module attributes {stable_mosaic.version = 11 : i64} {
  func.func @_kl_rows_kernel(%arg0: i32, %arg1: i32, %arg2: memref<8x256xf32, #tpu.memory_space<vmem>>, %arg3: memref<8x256xf32, #tpu.memory_space<vmem>>, %arg4: memref<1x1x8xf32, #tpu.memory_space<vmem>>) attributes {dimension_semantics = [#tpu.dimension_semantics<parallel>, #tpu.dimension_semantics<arbitrary>], iteration_bounds = array<i64: 2, 1>, scalar_prefetch = 0 : i64, scratch_operands = 0 : i64, tpu.core_type = #tpu.core_type<tc>, window_params = [{transform_indices = @transform_0, window_bounds = array<i64: 8, 256>}, {transform_indices = @transform_1, window_bounds = array<i64: 8, 256>}, {transform_indices = @transform_2, window_bounds = array<i64: 1, 1, 8>}]} {
    %c0 = arith.constant 0 : index
    %c0_0 = arith.constant 0 : index
    %0 = vector.load %arg2[%c0, %c0_0] : memref<8x256xf32, #tpu.memory_space<vmem>>, vector<8x256xf32>
    %c0_1 = arith.constant 0 : index
    %c0_2 = arith.constant 0 : index
    %1 = vector.load %arg3[%c0_1, %c0_2] : memref<8x256xf32, #tpu.memory_space<vmem>>, vector<8x256xf32>
    %c256_i32 = arith.constant 256 : i32
    %2 = arith.muli %arg1, %c256_i32 : i32
    %3 = tpu.iota {dimensions = array<i32: 1>} : vector<1x256xi32>
    %4 = vector.broadcast %2 : i32 to vector<1x256xi32>
    %5 = arith.addi %4, %3 : vector<1x256xi32>
    %cst = arith.constant 0.000000e+00 : f32
    %6 = vector.broadcast %cst : f32 to vector<8x256xf32>
    %7 = arith.cmpf ogt, %1, %6 : vector<8x256xf32>
    %c0_i32 = arith.constant 0 : i32
    %8 = vector.broadcast %c0_i32 : i32 to vector<1x256xi32>
    %9 = arith.cmpi ne, %5, %8 : vector<1x256xi32>
    %10 = vector.broadcast %9 : vector<1x256xi1> to vector<8x256xi1>
    %11 = arith.andi %7, %10 : vector<8x256xi1>
    %c256_i32_3 = arith.constant 256 : i32
    %12 = vector.broadcast %c256_i32_3 : i32 to vector<1x256xi32>
    %13 = arith.cmpi slt, %5, %12 : vector<1x256xi32>
    %14 = vector.broadcast %13 : vector<1x256xi1> to vector<8x256xi1>
    %15 = arith.andi %11, %14 : vector<8x256xi1>
    %cst_4 = arith.constant 1.000000e+00 : f32
    %16 = vector.broadcast %cst_4 : f32 to vector<8x256xf32>
    %17 = arith.select %15, %1, %16 : vector<8x256xi1>, vector<8x256xf32>
    %18 = math.log %17 : vector<8x256xf32>
    %19 = arith.subf %18, %0 : vector<8x256xf32>
    %20 = arith.mulf %1, %19 : vector<8x256xf32>
    %cst_5 = arith.constant 0.000000e+00 : f32
    %21 = vector.broadcast %cst_5 : f32 to vector<8x256xf32>
    %22 = arith.select %15, %20, %21 : vector<8x256xi1>, vector<8x256xf32>
    %cst_6 = arith.constant dense<0.000000e+00> : vector<8xf32>
    %23 = vector.multi_reduction <add>, %22, %cst_6 [1] : vector<8x256xf32> to vector<8xf32>
    %24 = vector.shape_cast %23 : vector<8xf32> to vector<8x1xf32>
    %c8_i32 = arith.constant 8 : i32
    %25 = arith.muli %arg0, %c8_i32 : i32
    %26 = tpu.iota {dimensions = array<i32: 0>} : vector<8x1xi32>
    %27 = vector.broadcast %25 : i32 to vector<8x1xi32>
    %28 = arith.addi %27, %26 : vector<8x1xi32>
    %c16_i32 = arith.constant 16 : i32
    %29 = vector.broadcast %c16_i32 : i32 to vector<8x1xi32>
    %30 = arith.cmpi slt, %28, %29 : vector<8x1xi32>
    %cst_7 = arith.constant 0.000000e+00 : f32
    %31 = vector.broadcast %cst_7 : f32 to vector<8x1xf32>
    %32 = arith.select %30, %24, %31 : vector<8x1xi1>, vector<8x1xf32>
    %33 = vector.shape_cast %32 : vector<8x1xf32> to vector<1x1x8xf32>
    %c0_i32_8 = arith.constant 0 : i32
    %34 = arith.cmpi eq, %arg1, %c0_i32_8 : i32
    %35 = arith.extui %34 : i1 to i32
    %c0_i32_9 = arith.constant 0 : i32
    %36 = arith.cmpi ne, %35, %c0_i32_9 : i32
    scf.if %36 {
      %cst_16 = arith.constant 0.000000e+00 : f32
      %40 = vector.broadcast %cst_16 : f32 to vector<1x1x8xf32>
      %c0_17 = arith.constant 0 : index
      %c0_18 = arith.constant 0 : index
      %c0_19 = arith.constant 0 : index
      %41 = vector.load %arg4[%c0_17, %c0_18, %c0_19] : memref<1x1x8xf32, #tpu.memory_space<vmem>>, vector<1x1x8xf32>
      tpu.vector_store %arg4[%c0_17, %c0_18, %c0_19], %40 {strides = array<i32>} : memref<1x1x8xf32, #tpu.memory_space<vmem>>, vector<1x1x8xf32>,
    } else {
    }
    %c0_10 = arith.constant 0 : index
    %c0_11 = arith.constant 0 : index
    %c0_12 = arith.constant 0 : index
    %37 = vector.load %arg4[%c0_10, %c0_11, %c0_12] : memref<1x1x8xf32, #tpu.memory_space<vmem>>, vector<1x1x8xf32>
    %38 = arith.addf %37, %33 : vector<1x1x8xf32>
    %c0_13 = arith.constant 0 : index
    %c0_14 = arith.constant 0 : index
    %c0_15 = arith.constant 0 : index
    %39 = vector.load %arg4[%c0_13, %c0_14, %c0_15] : memref<1x1x8xf32, #tpu.memory_space<vmem>>, vector<1x1x8xf32>
    tpu.vector_store %arg4[%c0_13, %c0_14, %c0_15], %38 {strides = array<i32>} : memref<1x1x8xf32, #tpu.memory_space<vmem>>, vector<1x1x8xf32>,
    return
  }
  func.func @transform_0(%arg0: i32, %arg1: i32) -> (i32, i32) {
    %c0_i32 = arith.constant 0 : i32
    return %arg0, %arg1 : i32, i32
  }
  func.func @transform_1(%arg0: i32, %arg1: i32) -> (i32, i32) {
    %c0_i32 = arith.constant 0 : i32
    return %arg0, %arg1 : i32, i32
  }
  func.func @transform_2(%arg0: i32, %arg1: i32) -> (i32, i32, i32) {
    %c0_i32 = arith.constant 0 : i32
    %c0_i32_0 = arith.constant 0 : i32
    %c0_i32_1 = arith.constant 0 : i32
    return %arg0, %c0_i32, %c0_i32_0 : i32, i32, i32
  }
}

</mosaic_0001>

<llo_original>
// kernel: tpu_custom_call.1
$region0: #{tpu_custom_call.1}
  #allocation0 [shape = 'u32[]', space=smem, size = 0x4, offset = 0x4, fixed_abs, tag = 'smem constant byte address 0x4 - core index']
  #allocation1 [shape = 'u32[144,128]{1,0:T(1,128)}', space=vmem, size = 0x12000, scoped, tag = 'internal scratch']
  %s0 = inlined_call_operand.hbm [shape: f32[16,256], index: 0, kind: input, shape index: {}]
  %s1 = inlined_call_operand.hbm [shape: f32[16,256], index: 1, kind: input, shape index: {}]
  %s2 = inlined_call_operand.hbm [shape: f32[2,1,8], index: 2, kind: output, shape index: {}]
  %s3 = sld [smem:[#allocation0]]
  $region53: #{tpu_custom_call.1} parent=0
    _
  %s5 = ssub.s32 1, %s3
  %s6 = scalar_select 0, %s5, %s3
  $region1: #{tpu_custom_call.1} parent=0
    #allocation2 [shape = 'u8[16384]{0}', space=vmem, size = 0x4000, scoped, tag = 'input window, operand 0']
    #allocation3 [shape = 's32[2]{0}', space=sflag, size = 0x8, scoped, tag = 'scoped memory for tpu_custom_call.1']
    #allocation4 [shape = 's32[2]{0}', space=sflag, size = 0x8, scoped, tag = 'scoped memory for tpu_custom_call.1']
    #allocation5 [shape = 'u8[16384]{0}', space=vmem, size = 0x4000, scoped, tag = 'input window, operand 1']
    #allocation6 [shape = 's32[2]{0}', space=sflag, size = 0x8, scoped, tag = 'scoped memory for tpu_custom_call.1']
    #allocation7 [shape = 'u8[1024]{0}', space=vmem, size = 0x400, scoped, tag = 'output window, operand 0']
    %7 = vsyncpa [#allocation3], 0
    %s8 = scalar_lea.sflag [#allocation3], 1
    %9 = vsyncpa %s8, 0
    %10 = vsyncpa [#allocation6], 0
    %s11 = scalar_lea.sflag [#allocation6], 1
    %12 = vsyncpa %s11, 0
    %13 = vsyncpa [#allocation4], 0
    %s14 = scalar_lea.sflag [#allocation4], 1
    %15 = vsyncpa %s14, 0
    loop: start=0, step=1, limit=4
    $region2: #{tpu_custom_call.1} parent=1 // loop_pre_header
      _
    $region3: #{tpu_custom_call.1} parent=1 // loop_header
      %s17 = sphi 0, %s21
      %p18 = scmp.ge.s32.totalorder %s17, 4
      %s24 = sphi 0, %s36
      %s25 = sphi 0, %s32
      %s26 = sphi 0, %s24
      %s27 = sphi 0, %s25
      %s28 = sphi 0, %s26
      %s29 = sphi 0, %s27
      %s41 = sphi 0, %s43
      %s44 = sphi 0, %s41
      %s45 = sphi 0, %s44
      %s61 = sphi 0, %s45
      %s69 = sphi 0, %s71
      %s72 = sphi 0, %s69
      %s73 = sphi 0, %s72
      %s89 = sphi 0, %s73
      %s95 = sphi 0, %s97
      %s98 = sphi 0, %s95
      %s99 = sphi 0, %s98
      %s115 = sphi 0, %s99
    $region4: #{tpu_custom_call.1} parent=1 // loop_header_branch
      %20 = sbr.rel (%p18) target = $region8
    $region5: #{tpu_custom_call.1} parent=1 // loop_body
      %s22 = ssub.s32 %s17, 1
      %s23 = ssub.s32 %s17, 2
      %s30 = sadd.s32 1, %s25
      %p31 = scmp.ge.s32.totalorder %s30, 1
      %s32 = scalar_select %p31, 0, %s30
      %s33 = sadd.s32 1, %s24
      %s34 = scalar_select %p31, %s33, %s24
      %p35 = scmp.ge.s32.totalorder %s34, 2
      %s36 = scalar_select %p35, 0, %s34
      %s37 = ssub.s32 %s24, %s36
      %s38 = ssub.s32 %s25, %s32
      %s39 = sor.u32 %s37, %s38
      %p40 = scmp.eq.s32.totalorder %s39, 0
      %s42 = sadd.s32 %s41, 1
      %s43 = scalar_select %p40, %s41, %s42
      %p46 = pneg %p40
      %p47 = scmp.eq.s32.totalorder %s17, 1
      %p48 = por %p46, %p47
      %p49 = scmp.ne.s32.totalorder %s41, %s44
      %p50 = scmp.eq.s32.totalorder %s17, 0
      %p51 = por %p49, %p50
      %p52 = scmp.ne.s32.totalorder %s41, %s44
      %p53 = scmp.eq.s32.totalorder %s22, 1
      %p54 = por %p52, %p53
      %p55 = scmp.ne.s32.totalorder %s44, %s45
      %p56 = scmp.eq.s32.totalorder %s22, 0
      %p57 = por %p55, %p56
      %p58 = scmp.ne.s32.totalorder %s44, %s45
      %p59 = scmp.eq.s32.totalorder %s23, 1
      %p60 = por %p58, %p59
      %p62 = scmp.ne.s32.totalorder %s45, %s61
      %p63 = scmp.eq.s32.totalorder %s23, 0
      %p64 = por %p62, %p63
      %s65 = ssub.s32 %s24, %s36
      %s66 = ssub.s32 %s25, %s32
      %s67 = sor.u32 %s65, %s66
      %p68 = scmp.eq.s32.totalorder %s67, 0
      %s70 = sadd.s32 %s69, 1
      %s71 = scalar_select %p68, %s69, %s70
      %p74 = pneg %p68
      %p75 = scmp.eq.s32.totalorder %s17, 1
      %p76 = por %p74, %p75
      %p77 = scmp.ne.s32.totalorder %s69, %s72
      %p78 = scmp.eq.s32.totalorder %s17, 0
      %p79 = por %p77, %p78
      %p80 = scmp.ne.s32.totalorder %s69, %s72
      %p81 = scmp.eq.s32.totalorder %s22, 1
      %p82 = por %p80, %p81
      %p83 = scmp.ne.s32.totalorder %s72, %s73
      %p84 = scmp.eq.s32.totalorder %s22, 0
      %p85 = por %p83, %p84
      %p86 = scmp.ne.s32.totalorder %s72, %s73
      %p87 = scmp.eq.s32.totalorder %s23, 1
      %p88 = por %p86, %p87
      %p90 = scmp.ne.s32.totalorder %s73, %s89
      %p91 = scmp.eq.s32.totalorder %s23, 0
      %p92 = por %p90, %p91
      %s93 = ssub.s32 %s24, %s36
      %p94 = scmp.eq.s32.totalorder %s93, 0
      %s96 = sadd.s32 %s95, 1
      %s97 = scalar_select %p94, %s95, %s96
      %p100 = pneg %p94
      %p101 = scmp.eq.s32.totalorder %s17, 1
      %p102 = por %p100, %p101
      %p103 = scmp.ne.s32.totalorder %s95, %s98
      %p104 = scmp.eq.s32.totalorder %s17, 0
      %p105 = por %p103, %p104
      %p106 = scmp.ne.s32.totalorder %s95, %s98
      %p107 = scmp.eq.s32.totalorder %s22, 1
      %p108 = por %p106, %p107
      %p109 = scmp.ne.s32.totalorder %s98, %s99
      %p110 = scmp.eq.s32.totalorder %s22, 0
      %p111 = por %p109, %p110
      %p112 = scmp.ne.s32.totalorder %s98, %s99
      %p113 = scmp.eq.s32.totalorder %s23, 1
      %p114 = por %p112, %p113
      %p116 = scmp.ne.s32.totalorder %s99, %s115
      %p117 = scmp.eq.s32.totalorder %s23, 0
      %p118 = por %p116, %p117
      %p119 = scmp.le.s32.totalorder 1, %s17
      %p120 = scmp.lt.s32.totalorder %s17, 3
      %p121 = pnand %p119, %p120
      %p122 = pneg %p121
      // Predicated region
      $region9: #{tpu_custom_call.1} parent=5 // pred_check
        _
      $region10: #{tpu_custom_call.1} parent=5 // pred_check_branch
        %124 = sbr.rel (%p121) target = $region12
      $region11: #{tpu_custom_call.1} parent=5 // pred_region
        %s125 = ssub.s32 %s17, 1
      $region12: #{tpu_custom_call.1} parent=5 // pred_fallthru
        _
      %p126 = scmp.lt.s32.totalorder %s17, 2
      // Predicated region
      $region13: #{tpu_custom_call.1} parent=5 // pred_check
        %p127 = pneg %p126
      $region14: #{tpu_custom_call.1} parent=5 // pred_check_branch
        %129 = sbr.rel (%p127) target = $region16
      $region15: #{tpu_custom_call.1} parent=5 // pred_region
        // Predicated region
        $region17: #{tpu_custom_call.1} parent=15 // pred_check
          %p130 = pneg %p51
        $region18: #{tpu_custom_call.1} parent=15 // pred_check_branch
          %132 = sbr.rel (%p130) target = $region20
        $region19: #{tpu_custom_call.1} parent=15 // pred_region
          %s133 = sand.u32 %s41, 1
          %s134 = scalar_lea.sflag [#allocation3], %s133
          %s135 = sand.u32 %s41, 1
          %s136 = smul.addr %s135, 16
          %s137 = scalar_lea.vmem [#allocation2], %s136
          %s138 = smul.u32 2, %s25
          %s140 = ssub.s32 256, 256
          %141 = vsyncadd %s134, %s140
          %s142 = smul.addr %s24, 2
          %s143 = sadd.s32 %s138, %s142
          %s144 = smul.addr %s143, 128
          %s145 = scalar_lea.hbm %s0, %s144
          %s147 = sshll.u32 %s137, 4
          %s148 = int_to_ptr.vmem [resolvable:$true] %s147
          %150 = dma.hbm_to_vmem [thread:$0]  %s145, 256, %s148, %s134
        $region20: #{tpu_custom_call.1} parent=15 // pred_fallthru
          _
        // Predicated region
        $region21: #{tpu_custom_call.1} parent=15 // pred_check
          %p151 = pneg %p79
        $region22: #{tpu_custom_call.1} parent=15 // pred_check_branch
          %153 = sbr.rel (%p151) target = $region24
        $region23: #{tpu_custom_call.1} parent=15 // pred_region
          %s154 = sand.u32 %s69, 1
          %s155 = scalar_lea.sflag [#allocation6], %s154
          %s156 = sand.u32 %s69, 1
          %s157 = smul.addr %s156, 16
          %s158 = scalar_lea.vmem [#allocation5], %s157
          %s159 = smul.u32 2, %s25
          %s161 = ssub.s32 256, 256
          %162 = vsyncadd %s155, %s161
          %s163 = smul.addr %s24, 2
          %s164 = sadd.s32 %s159, %s163
          %s165 = smul.addr %s164, 128
          %s166 = scalar_lea.hbm %s1, %s165
          %s168 = sshll.u32 %s158, 4
          %s169 = int_to_ptr.vmem [resolvable:$true] %s168
          %171 = dma.hbm_to_vmem [thread:$0]  %s166, 256, %s169, %s155
        $region24: #{tpu_custom_call.1} parent=15 // pred_fallthru
          _
      $region16: #{tpu_custom_call.1} parent=5 // pred_fallthru
        _
      %p172 = scmp.le.s32.totalorder 1, %s17
      %p173 = scmp.lt.s32.totalorder %s17, 3
      %p174 = pnand %p172, %p173
      %p175 = pneg %p174
      // Predicated region
      $region25: #{tpu_custom_call.1} parent=5 // pred_check
        _
      $region26: #{tpu_custom_call.1} parent=5 // pred_check_branch
        %177 = sbr.rel (%p174) target = $region28
      $region27: #{tpu_custom_call.1} parent=5 // pred_region
        %s178 = ssub.s32 %s17, 1
        %s179 = sand.u32 %s44, 1
        %s180 = scalar_lea.sflag [#allocation3], %s179
        %s181 = sand.u32 %s44, 1
        %s182 = smul.addr %s181, 16
        %s183 = scalar_lea.vmem [#allocation2], %s182
        // Predicated region
        $region29: #{tpu_custom_call.1} parent=27 // pred_check
          %p184 = pneg %p57
        $region30: #{tpu_custom_call.1} parent=27 // pred_check_branch
          %186 = sbr.rel (%p184) target = $region32
        $region31: #{tpu_custom_call.1} parent=27 // pred_region
          %187 = dma.done %s180, 256
        $region32: #{tpu_custom_call.1} parent=27 // pred_fallthru
          _
        %s188 = sand.u32 %s72, 1
        %s189 = scalar_lea.sflag [#allocation6], %s188
        %s190 = sand.u32 %s72, 1
        %s191 = smul.addr %s190, 16
        %s192 = scalar_lea.vmem [#allocation5], %s191
        // Predicated region
        $region33: #{tpu_custom_call.1} parent=27 // pred_check
          %p193 = pneg %p85
        $region34: #{tpu_custom_call.1} parent=27 // pred_check_branch
          %195 = sbr.rel (%p193) target = $region36
        $region35: #{tpu_custom_call.1} parent=27 // pred_region
          %196 = dma.done %s189, 256
        $region36: #{tpu_custom_call.1} parent=27 // pred_fallthru
          _
        %s197 = sand.u32 %s44, 1
        %s198 = scalar_lea.sflag [#allocation3], %s197
        %s199 = sand.u32 %s44, 1
        %s200 = smul.addr %s199, 16
        %s201 = scalar_lea.vmem [#allocation2], %s200
        %p202 = pneg %p57
        %p203 = pneg %p54
        %s204 = sand.u32 %s72, 1
        %s205 = scalar_lea.sflag [#allocation6], %s204
        %s206 = sand.u32 %s72, 1
        %s207 = smul.addr %s206, 16
        %s208 = scalar_lea.vmem [#allocation5], %s207
        %p209 = pneg %p85
        %p210 = pneg %p82
        %p211 = pneg %p111
        %p212 = pneg %p108
        %s213 = sand.u32 %s98, 1
        %s214 = scalar_lea.sflag [#allocation4], %s213
        %s215 = sand.u32 %s98, 1
        %s216 = scalar_lea.vmem [#allocation7], %s215
        %s217 = smul.u32 2, %s27
        %s218 = smul.u32 2, %s27
        %v219 = vld [vmem:[%s183] sm:$0xff]
        %v220 = vld [vmem:[%s183 + $0x8] sm:$0xff]
        %v221 = vld [vmem:[%s192] sm:$0xff]
        %v222 = vld [vmem:[%s192 + $0x8] sm:$0xff]
        %s223 = smul.u32 %s27, 256
        %v224 = vlaneseq
        %v225 = vand.u32 %v224, 127
        %v226 = vadd.s32 %v225, 128
        %v227 = vstv %s223
        %v228 = vadd.s32 %v227, %v225
        %v229 = vadd.s32 %v227, %v226
        %vm230 = vcmp.gt.f32.partialorder %v221, 0.0
        %vm231 = vcmp.gt.f32.partialorder %v222, 0.0
        %vm232 = vcmp.ne.s32.totalorder %v228, 0
        %vm233 = vcmp.ne.s32.totalorder %v229, 0
        %v234 = vsel %vm232, 1, 0
        %v235 = vsel %vm233, 1, 0
        %vm236 = vcmp.eq.s32.totalorder %v234, 1
        %vm237 = vcmp.eq.s32.totalorder %v235, 1
        %vm238 = vmand %vm230, %vm236
        %vm239 = vmand %vm231, %vm237
        %vm240 = vcmp.lt.s32.totalorder %v228, 256
        %vm241 = vcmp.lt.s32.totalorder %v229, 256
        %v242 = vsel %vm240, 1, 0
        %v243 = vsel %vm241, 1, 0
        %vm244 = vcmp.eq.s32.totalorder %v242, 1
        %vm245 = vcmp.eq.s32.totalorder %v243, 1
        %vm246 = vmand %vm238, %vm244
        %vm247 = vmand %vm239, %vm245
        %v248 = vsel %vm246, %v221, 1.0
        %v249 = vsel %vm247, %v222, 1.0
        %v250 = vlog2.pop %v248
        %v251 = vmul.f32 %v250, 0.6931472
        %v252 = vlog2.pop %v249
        %v253 = vmul.f32 %v252, 0.6931472
        %v254 = vsub.f32 %v251, %v219
        %v255 = vsub.f32 %v253, %v220
        %v256 = vmul.f32 %v221, %v254
        %v257 = vmul.f32 %v222, %v255
        %v258 = vsel %vm246, %v256, 0.0
        %v259 = vsel %vm247, %v257, 0.0
        %v260 = vadd.f32 %v258, %v259
        %261 = vadd.xlane.f32.xlu0 %v260
        %v262 = vpop.xlane.xlu0 %261
        %s263 = smul.u32 %s26, 8
        %v264 = vlaneseq
        %v265 = vshrl.u32 %v264, 7
        %v266 = vstv %s263
        %v267 = vadd.s32 %v266, %v265
        %vm268 = vcmp.lt.s32.totalorder %v267, 16
        %v269 = vsel %vm268, %v262, 0.0
        %p270 = scmp.eq.s32.totalorder %s27, 0
        // Predicated region
        $region37: #{tpu_custom_call.1} parent=27 // pred_check
          %p271 = pneg %p270
        $region38: #{tpu_custom_call.1} parent=27 // pred_check_branch
          %273 = sbr.rel (%p271) target = $region40
        $region39: #{tpu_custom_call.1} parent=27 // pred_region
          %vm274 = vcmask 57344
          %275 = vst.msk [vmem:[%s216] sm:$0x1] %vm274, 0.0
        $region40: #{tpu_custom_call.1} parent=27 // pred_fallthru
          _
        %v276 = vld [vmem:[%s216] sm:$0x1]
        %v278 = vlaneseq
        %v279 = vshrl.u32 %v278, 7
        %v280 = vsub.s32 0, %v279
        %v281 = vrot.slane %v269, %v280
        %v282 = vlaneseq
        %v283 = vshrl.u32 %v282, 7
        %v284 = vsub.s32 1, %v283
        %v285 = vrot.slane %v269, %v284
        %v286 = vlaneseq
        %v287 = vshrl.u32 %v286, 7
        %v288 = vsub.s32 2, %v287
        %v289 = vrot.slane %v269, %v288
        %v290 = vlaneseq
        %v291 = vshrl.u32 %v290, 7
        %v292 = vsub.s32 3, %v291
        %v293 = vrot.slane %v269, %v292
        %v294 = vlaneseq
        %v295 = vshrl.u32 %v294, 7
        %v296 = vsub.s32 4, %v295
        %v297 = vrot.slane %v269, %v296
        %v298 = vlaneseq
        %v299 = vshrl.u32 %v298, 7
        %v300 = vsub.s32 5, %v299
        %v301 = vrot.slane %v269, %v300
        %v302 = vlaneseq
        %v303 = vshrl.u32 %v302, 7
        %v304 = vsub.s32 6, %v303
        %v305 = vrot.slane %v269, %v304
        %v306 = vlaneseq
        %v307 = vshrl.u32 %v306, 7
        %v308 = vsub.s32 7, %v307
        %v309 = vrot.slane %v269, %v308
        %v310 = vcombine.low %v281, %v285
        %v311 = vcombine.low %v289, %v293
        %v312 = vcombine.low %v297, %v301
        %v313 = vcombine.low %v305, %v309
        %v315 = vunpack.c.l.s4 1966171168
        %v316 = vunpack.c.0.s8 %v315
        %v317 = vlaneseq
        %v318 = vshrl.u32 %v317, 7
        %v319 = vsub.s32 %v316, %v318
        %v320 = vrot.slane %v310, %v319
        %v322 = vunpack.c.l.s4 1966171168
        %v323 = vunpack.c.0.s8 %v322
        %v324 = vlaneseq
        %v325 = vshrl.u32 %v324, 7
        %v326 = vsub.s32 %v323, %v325
        %v327 = vrot.slane %v311, %v326
        %v329 = vunpack.c.l.s4 1966171168
        %v330 = vunpack.c.0.s8 %v329
        %v331 = vlaneseq
        %v332 = vshrl.u32 %v331, 7
        %v333 = vsub.s32 %v330, %v332
        %v334 = vrot.slane %v312, %v333
        %v336 = vunpack.c.l.s4 1966171168
        %v337 = vunpack.c.0.s8 %v336
        %v338 = vlaneseq
        %v339 = vshrl.u32 %v338, 7
        %v340 = vsub.s32 %v337, %v339
        %v341 = vrot.slane %v313, %v340
        %v342 = vcombine.low %v320, %v327
        %v343 = vcombine.low %v334, %v341
        %v345 = vunpack.c.l.s4 1966171168
        %v346 = vunpack.c.0.s8 %v345
        %v347 = vlaneseq
        %v348 = vshrl.u32 %v347, 7
        %v349 = vsub.s32 %v346, %v348
        %v350 = vrot.slane %v342, %v349
        %v352 = vunpack.c.l.s4 1966171168
        %v353 = vunpack.c.0.s8 %v352
        %v354 = vlaneseq
        %v355 = vshrl.u32 %v354, 7
        %v356 = vsub.s32 %v353, %v355
        %v357 = vrot.slane %v343, %v356
        %v358 = vcombine.low %v350, %v357
        %359 = vset.pattern.permute.xlu0 0
        %360 = vperm.xlu0 %359, %v358
        %v361 = vpop.permute.xlu0 %360
        %v362 = vlaneseq
        %v363 = vshrl.u32 %v362, 7
        %v364 = vsub.s32 %v225, %v363
        %v365 = vrot.slane %v361, %v364
        %v367 = vunpack.c.l.s4 1966171168
        %v368 = vunpack.c.0.s8 %v367
        %v369 = vlaneseq
        %v370 = vshrl.u32 %v369, 7
        %v371 = vsub.s32 %v368, %v370
        %v372 = vrot.slane %v365, %v371
        %v374 = vunpack.c.l.s4 1966171168
        %v375 = vunpack.c.0.s8 %v374
        %v376 = vlaneseq
        %v377 = vshrl.u32 %v376, 7
        %v378 = vsub.s32 %v375, %v377
        %v379 = vrot.slane %v372, %v378
        %v381 = vadd.f32 %v276, %v379
        %vm382 = vcmask 57344
        %383 = vst.msk [vmem:[%s216] sm:$0x1] %vm382, %v381
        %s384 = sand.u32 %s98, 1
        %s385 = scalar_lea.sflag [#allocation4], %s384
        %s386 = sand.u32 %s98, 1
        %s387 = scalar_lea.vmem [#allocation7], %s386
        // Predicated region
        $region41: #{tpu_custom_call.1} parent=27 // pred_check
          %p388 = pneg %p108
        $region42: #{tpu_custom_call.1} parent=27 // pred_check_branch
          %390 = sbr.rel (%p388) target = $region44
        $region43: #{tpu_custom_call.1} parent=27 // pred_region
          %s392 = ssub.s32 16, 16
          %393 = vsyncadd %s385, %s392
          %s394 = smul.addr %s26, 16
          %s395 = scalar_lea.hbm %s2, %s394
          %s397 = sshll.u32 %s387, 4
          %s398 = int_to_ptr.vmem [resolvable:$true] %s397
          %400 = dma.vmem_to_hbm [thread:$0]  %s398, 16, %s395, %s385
        $region44: #{tpu_custom_call.1} parent=27 // pred_fallthru
          _
      $region28: #{tpu_custom_call.1} parent=5 // pred_fallthru
        _
      %p401 = scmp.le.s32.totalorder 2, %s17
      // Predicated region
      $region45: #{tpu_custom_call.1} parent=5 // pred_check
        %p402 = pneg %p401
      $region46: #{tpu_custom_call.1} parent=5 // pred_check_branch
        %404 = sbr.rel (%p402) target = $region48
      $region47: #{tpu_custom_call.1} parent=5 // pred_region
        %s405 = ssub.s32 %s17, 2
        // Predicated region
        $region49: #{tpu_custom_call.1} parent=47 // pred_check
          %p406 = pneg %p114
        $region50: #{tpu_custom_call.1} parent=47 // pred_check_branch
          %408 = sbr.rel (%p406) target = $region52
        $region51: #{tpu_custom_call.1} parent=47 // pred_region
          %s409 = sand.u32 %s99, 1
          %s410 = scalar_lea.sflag [#allocation4], %s409
          %s411 = sand.u32 %s99, 1
          %s412 = scalar_lea.vmem [#allocation7], %s411
          %413 = dma.done %s410, 16
        $region52: #{tpu_custom_call.1} parent=47 // pred_fallthru
          _
      $region48: #{tpu_custom_call.1} parent=5 // pred_fallthru
        _
    $region6: #{tpu_custom_call.1} parent=1 // loop_footer
      %s21 = sadd.s32 1, %s17
    $region7: #{tpu_custom_call.1} parent=1 // loop_footer_branch
      %16 = sbr.rel target = $region3
    $region8: #{tpu_custom_call.1} parent=1 // loop_exit
      _
    %414 = vsyncpa [#allocation3], 1
    %s415 = scalar_lea.sflag [#allocation3], 1
    %416 = vsyncpa %s415, 1
    %417 = vsyncpa [#allocation6], 1
    %s418 = scalar_lea.sflag [#allocation6], 1
    %419 = vsyncpa %s418, 1
    %420 = vsyncpa [#allocation4], 1
    %s421 = scalar_lea.sflag [#allocation4], 1
    %422 = vsyncpa %s421, 1

</llo_original>
